<compile_context>
chip_gen: v5e
topology: v5e:2x2
jax: 0.10.0
libtpu: 0.0.40
codegen_flags: <defaults>
</compile_context>

<pallas_src>
import jax
import jax.numpy as jnp
from jax.experimental import pallas as pl
from jax.experimental.pallas import tpu as pltpu


def _pos_embed_kernel(wpos_ref, out_ref):
    # wpos_ref: (TQ, TD) tile of W_pos
    # out_ref : (batch, TQ, TD) tile of the output -- broadcast over batch and
    #           write as a single lane-dense assignment.
    out_ref[...] = jnp.broadcast_to(wpos_ref[...][None, :, :], out_ref.shape)


def _pick_tiles(batch, seq_len, d_model, itemsize,
                vmem_budget_bytes=12 * 1024 * 1024):
    """Pick (TQ, TD) respecting the (8, 128) alignment rule while keeping the
    double-buffered input + batch-wide output tiles under a VMEM budget."""
    # Lane (last) dim: prefer the full d_model (always a legal block dim);
    # only tile to a multiple of 128 if d_model is very large.
    if d_model <= 2048:
        td = d_model
    else:
        td = 2048

    # Sublane (seq) dim: full seq_len if small, otherwise multiples of 8.
    if seq_len <= 512:
        tq = seq_len
    else:
        tq = 512

    def fits(t_q, t_d):
        # double-buffered input tile + double-buffered batch-wide output tile
        return 2 * (batch + 1) * t_q * t_d * itemsize <= vmem_budget_bytes

    # Shrink TQ (keeping multiples of 8 when it is not the full seq_len) until
    # the working set fits.
    while not fits(tq, td) and tq > 8:
        nxt = max(8, ((tq // 2) // 8) * 8)
        if nxt == tq:
            break
        tq = nxt
    # If still too big (huge batch), shrink TD as well.
    while not fits(tq, td) and td > 128:
        nxt = max(128, ((td // 2) // 128) * 128)
        if nxt == td:
            break
        td = nxt
    return tq, td


def pos_embedding(tokens: jax.Array, w_pos: jax.Array) -> jax.Array:
    """Equivalent of PosEmbedding.forward: broadcast W_pos[:seq_len] over batch."""
    batch, seq_len = tokens.shape
    n_ctx, d_model = w_pos.shape
    assert seq_len <= n_ctx, "seq_len must not exceed n_ctx"

    # Cheap XLA slice so the kernel tiles exactly the rows it needs and the
    # (8, 128) block rule holds even when seq_len < n_ctx.
    w_pos_seq = w_pos[:seq_len]

    tq, td = _pick_tiles(batch, seq_len, d_model, w_pos.dtype.itemsize)
    grid = (pl.cdiv(seq_len, tq), pl.cdiv(d_model, td))

    return pl.pallas_call(
        _pos_embed_kernel,
        out_shape=jax.ShapeDtypeStruct((batch, seq_len, d_model), w_pos.dtype),
        grid_spec=pltpu.PrefetchScalarGridSpec(
            num_scalar_prefetch=0,
            grid=grid,
            in_specs=[
                # (TQ, TD) tile of W_pos matching the output tile.
                pl.BlockSpec((tq, td), lambda q, d: (q, d)),
            ],
            # One batch-wide, lane-dense output slab per grid step.
            out_specs=pl.BlockSpec((batch, tq, td), lambda q, d: (0, q, d)),
        ),
        compiler_params=pltpu.CompilerParams(
            dimension_semantics=("parallel", "parallel"),
        ),
    )(w_pos_seq)


if __name__ == "__main__":
    # Synthetic config: n_ctx=16, d_model=128, init_range=0.02
    n_ctx, d_model, init_range = 16, 128, 0.02
    batch, seq_len = 2, 8

    key = jax.random.PRNGKey(0)
    k_w, k_tok = jax.random.split(key)

    # Deterministic parameter init (matches nn.init.normal_(std=init_range)).
    w_pos = init_range * jax.random.normal(k_w, (n_ctx, d_model), dtype=jnp.float32)
    tokens = jax.random.randint(k_tok, (batch, seq_len), 0, 100, dtype=jnp.int32)

    out = pos_embedding(tokens, w_pos)
    out = jax.block_until_ready(out)

    # Reference check (pure JAX broadcast).
    ref = jnp.broadcast_to(w_pos[:seq_len][None, :, :], (batch, seq_len, d_model))
    assert out.shape == (batch, seq_len, d_model)
    assert out.dtype == jnp.float32
    assert jnp.array_equal(out, ref)

    print("KERNEL_OK")
</pallas_src>

<mosaic_0001>
module attributes {stable_mosaic.version = 11 : i64} {
  func.func @_pos_embed_kernel(%arg0: i32, %arg1: i32, %arg2: memref<8x128xf32, #tpu.memory_space<vmem>>, %arg3: memref<2x8x128xf32, #tpu.memory_space<vmem>>) attributes {dimension_semantics = [#tpu.dimension_semantics<parallel>, #tpu.dimension_semantics<parallel>], iteration_bounds = array<i64: 1, 1>, scalar_prefetch = 0 : i64, scratch_operands = 0 : i64, tpu.core_type = #tpu.core_type<tc>, window_params = [{transform_indices = @transform_0, window_bounds = array<i64: 8, 128>}, {transform_indices = @transform_1, window_bounds = array<i64: 2, 8, 128>}]} {
    %c0 = arith.constant 0 : index
    %c0_0 = arith.constant 0 : index
    %0 = vector.load %arg2[%c0, %c0_0] : memref<8x128xf32, #tpu.memory_space<vmem>>, vector<8x128xf32>
    %1 = vector.shape_cast %0 : vector<8x128xf32> to vector<1x8x128xf32>
    %2 = vector.shape_cast %1 : vector<1x8x128xf32> to vector<1x8x128xf32>
    %3 = vector.broadcast %2 : vector<1x8x128xf32> to vector<2x8x128xf32>
    %c0_1 = arith.constant 0 : index
    %c0_2 = arith.constant 0 : index
    %c0_3 = arith.constant 0 : index
    %4 = vector.load %arg3[%c0_1, %c0_2, %c0_3] : memref<2x8x128xf32, #tpu.memory_space<vmem>>, vector<2x8x128xf32>
    tpu.vector_store %arg3[%c0_1, %c0_2, %c0_3], %3 {strides = array<i32>} : memref<2x8x128xf32, #tpu.memory_space<vmem>>, vector<2x8x128xf32>,
    return
  }
  func.func @transform_0(%arg0: i32, %arg1: i32) -> (i32, i32) {
    %c0_i32 = arith.constant 0 : i32
    return %arg0, %arg1 : i32, i32
  }
  func.func @transform_1(%arg0: i32, %arg1: i32) -> (i32, i32, i32) {
    %c0_i32 = arith.constant 0 : i32
    %c0_i32_0 = arith.constant 0 : i32
    return %c0_i32, %arg0, %arg1 : i32, i32, i32
  }
}

</mosaic_0001>

<llo_original>
// kernel: tpu_custom_call.1
$region0: #{tpu_custom_call.1}
  #allocation0 [shape = 'u32[]', space=smem, size = 0x4, offset = 0x4, fixed_abs, tag = 'smem constant byte address 0x4 - core index']
  #allocation1 [shape = 'u32[72,128]{1,0:T(1,128)}', space=vmem, size = 0x9000, scoped, tag = 'internal scratch']
  %s0 = inlined_call_operand.hbm [shape: f32[8,128], index: 0, kind: input, shape index: {}]
  %s1 = inlined_call_operand.hbm [shape: f32[2,8,128], index: 1, kind: output, shape index: {}]
  %s2 = sld [smem:[#allocation0]]
  $region18: #{tpu_custom_call.1} parent=0
    _
  %s4 = ssub.s32 1, %s2
  %s5 = scalar_select 0, %s4, %s2
  $region1: #{tpu_custom_call.1} parent=0
    #allocation2 [shape = 'u8[4096]{0}', space=vmem, size = 0x1000, scoped, tag = 'input window, operand 0, single buffered']
    #allocation3 [shape = 's32[1]{0}', space=sflag, size = 0x4, scoped, tag = 'scoped memory for tpu_custom_call.1']
    #allocation4 [shape = 's32[1]{0}', space=sflag, size = 0x4, scoped, tag = 'scoped memory for tpu_custom_call.1']
    #allocation5 [shape = 'u8[8192]{0}', space=vmem, size = 0x2000, scoped, tag = 'output window, operand 0, single buffered']
    %6 = vsyncpa [#allocation3], 0
    %7 = vsyncpa [#allocation4], 0
    // Predicated region
    $region2: #{tpu_custom_call.1} parent=1 // pred_check
      _
    $region3: #{tpu_custom_call.1} parent=1 // pred_check_branch
      %9 = sbr.rel (0) target = $region5
    $region4: #{tpu_custom_call.1} parent=1 // pred_region
      %11 = vsyncadd [#allocation3], 0
      %s13 = sshll.u32 %s0, 4
      %s14 = int_to_ptr.hbm [resolvable:$true] %s13
      %s15 = sshll.u32 [#allocation2], 4
      %s16 = int_to_ptr.vmem [resolvable:$true] %s15
      %18 = dma.hbm_to_vmem [thread:$0]  %s14, 128, %s16, [#allocation3]
    $region5: #{tpu_custom_call.1} parent=1 // pred_fallthru
      _
    // Predicated region
    $region6: #{tpu_custom_call.1} parent=1 // pred_check
      _
    $region7: #{tpu_custom_call.1} parent=1 // pred_check_branch
      %20 = sbr.rel (0) target = $region9
    $region8: #{tpu_custom_call.1} parent=1 // pred_region
      %22 = dma.done [#allocation3], 128
    $region9: #{tpu_custom_call.1} parent=1 // pred_fallthru
      _
    %v23 = vld [vmem:[#allocation2] sm:$0xff]
    %24 = vst [vmem:[#allocation5] sm:$0xff] %v23
    %25 = vst [vmem:[#allocation5 + $0x8] sm:$0xff] %v23
    // Predicated region
    $region10: #{tpu_custom_call.1} parent=1 // pred_check
      _
    $region11: #{tpu_custom_call.1} parent=1 // pred_check_branch
      %27 = sbr.rel (0) target = $region13
    $region12: #{tpu_custom_call.1} parent=1 // pred_region
      %29 = vsyncadd [#allocation4], 0
      %s30 = sshll.u32 [#allocation5], 4
      %s31 = int_to_ptr.vmem [resolvable:$true] %s30
      %s32 = sshll.u32 %s1, 4
      %s33 = int_to_ptr.hbm [resolvable:$true] %s32
      %38 = dma.vmem_to_hbm [thread:$0]  %s31, 256, %s33, [#allocation4], 128, 128, 8
    $region13: #{tpu_custom_call.1} parent=1 // pred_fallthru
      _
    // Predicated region
    $region14: #{tpu_custom_call.1} parent=1 // pred_check
      _
    $region15: #{tpu_custom_call.1} parent=1 // pred_check_branch
      %40 = sbr.rel (0) target = $region17
    $region16: #{tpu_custom_call.1} parent=1 // pred_region
      %42 = dma.done [#allocation4], 256
    $region17: #{tpu_custom_call.1} parent=1 // pred_fallthru
      _
    %43 = vsyncpa [#allocation3], 1
    %44 = vsyncpa [#allocation4], 1

</llo_original>
